<compile_context>
chip_gen: v6e
topology: v6e:2x2x1
jax: 0.10.0
libtpu: 0.0.40
codegen_flags: <defaults>
</compile_context>

<pallas_src>
import jax
import jax.numpy as jnp
from jax.experimental import pallas as pl
from jax.experimental.pallas import tpu as pltpu


def _round_up(x, m):
    return (x + m - 1) // m * m


def _tile_vmem_bytes(blk_m, K, N, in_bytes, out_bytes):
    """Physical (lane-padded) VMEM footprint of one pipelined grid step."""
    k_l = _round_up(K, 128)
    n_l = _round_up(N, 128)
    return (2 * blk_m * k_l * in_bytes          # patches tile, double-buffered
            + 2 * blk_m * n_l * out_bytes       # output tile, double-buffered
            + 2 * _round_up(K, 8) * n_l * in_bytes   # resident weight (+ headroom)
            + 2 * 8 * n_l * 4)                  # resident bias


# -----------------------------------------------------------------------------
# Pallas kernel: one (blk_m, K) patches tile @ resident (K, N) weight,
# f32 accumulation, f32 bias add, cast to output dtype on store.
# -----------------------------------------------------------------------------
def _proj_kernel(p_ref, w_ref, b_ref, o_ref):
    acc = jnp.dot(p_ref[...], w_ref[...], preferred_element_type=jnp.float32)
    o_ref[...] = (acc + b_ref[...]).astype(o_ref.dtype)


def _proj_pallas(patches, weight_2d, bias_2d, *, block_m, out_dtype):
    M, K = patches.shape
    _, N = weight_2d.shape
    grid = (pl.cdiv(M, block_m),)

    in_bytes = patches.dtype.itemsize
    out_bytes = jnp.dtype(out_dtype).itemsize
    footprint = _tile_vmem_bytes(block_m, K, N, in_bytes, out_bytes)
    vmem_limit = int(min(max(footprint + (4 << 20), 32 << 20), 48 << 20))

    flops = 2 * M * K * N
    bytes_accessed = (M * K * in_bytes + K * N * in_bytes
                      + N * bias_2d.dtype.itemsize + M * N * out_bytes)

    return pl.pallas_call(
        _proj_kernel,
        out_shape=jax.ShapeDtypeStruct((M, N), out_dtype),
        grid_spec=pltpu.PrefetchScalarGridSpec(
            num_scalar_prefetch=0,
            grid=grid,
            in_specs=[
                pl.BlockSpec((block_m, K), lambda i: (i, 0)),   # patches tile
                pl.BlockSpec((K, N), lambda i: (0, 0)),         # weight (resident)
                pl.BlockSpec((1, N), lambda i: (0, 0)),         # bias (resident)
            ],
            out_specs=pl.BlockSpec((block_m, N), lambda i: (i, 0)),
        ),
        compiler_params=pltpu.CompilerParams(
            dimension_semantics=("parallel",),
            vmem_limit_bytes=vmem_limit,
        ),
        cost_estimate=pl.CostEstimate(
            flops=flops, transcendentals=0, bytes_accessed=bytes_accessed),
    )(patches, weight_2d, bias_2d)


# -----------------------------------------------------------------------------
# PatchEmbed forward: x (B, C, H, W) -> (B, H_out, W_out, embed_dim)
# -----------------------------------------------------------------------------
def patch_embed_forward(x, weight, bias, *, kernel_size=(7, 7), stride=(4, 4),
                        padding=(3, 3), compute_dtype=jnp.bfloat16,
                        block_m=4096, out_dtype=None):
    """x: (B, C, H, W); weight: (embed_dim, C, kh, kw) [PyTorch OIHW]; bias: (embed_dim,)."""
    B, C, H, W = x.shape
    kh, kw = kernel_size
    sh, sw = stride
    ph, pw = padding
    N = weight.shape[0]
    # Downstream Hiera blocks can accept bf16 output; default preserves x.dtype.
    out_dtype = x.dtype if out_dtype is None else jnp.dtype(out_dtype)

    H_out = (H + 2 * ph - kh) // sh + 1
    W_out = (W + 2 * pw - kw) // sw + 1
    M = B * H_out * W_out
    K = C * kh * kw

    # ---- im2col: one fused XLA op, NHWC output layout, compute dtype. --------
    # Feature ordering of the K axis is (C, kh, kw), matching the PyTorch OIHW
    # weight flatten; casting the (small) input means the (large) patches array
    # is produced in bf16 directly with no extra HBM pass.
    patches = jax.lax.conv_general_dilated_patches(
        x.astype(compute_dtype), filter_shape=(kh, kw), window_strides=(sh, sw),
        padding=[(ph, ph), (pw, pw)],
        dimension_numbers=("NCHW", "OIHW", "NHWC"),
    )                                               # (B, H_out, W_out, K)
    patches = patches.reshape(M, K)                 # free (contiguous) reshape

    weight_2d = weight.reshape(N, K).T.astype(compute_dtype)   # (K, N), tiny
    bias_2d = bias.reshape(1, N).astype(jnp.float32)           # (1, N), tiny

    # ---- M tiling: large block (cdiv grid, masked tail), no patches padding. --
    in_b = jnp.dtype(compute_dtype).itemsize
    out_b = jnp.dtype(out_dtype).itemsize
    blk_m = M if M <= block_m else _round_up(block_m, 8)
    while blk_m > 1024 and _tile_vmem_bytes(blk_m, K, N, in_b, out_b) > (40 << 20):
        blk_m = max(1024, (blk_m // 16) * 8)        # halve, keep multiple of 8

    out_flat = _proj_pallas(patches, weight_2d, bias_2d,
                            block_m=blk_m, out_dtype=out_dtype)

    # (M, N) -> (B, H_out, W_out, N)  == permute(0, 2, 3, 1) of the NCHW conv out
    return out_flat.reshape(B, H_out, W_out, N)


# -----------------------------------------------------------------------------
# Reference (pure JAX) for verification
# -----------------------------------------------------------------------------
def patch_embed_reference(x, weight, bias, *, stride=(4, 4), padding=(3, 3)):
    out = jax.lax.conv_general_dilated(
        x, weight, window_strides=stride,
        padding=[(padding[0], padding[0]), (padding[1], padding[1])],
        dimension_numbers=("NCHW", "OIHW", "NCHW"),
    )
    out = out + bias[None, :, None, None]
    return jnp.transpose(out, (0, 2, 3, 1))


if __name__ == "__main__":
    # Small shapes consistent with the module: B=2, in_chans=4, H=W=16, embed_dim=32.
    B, C, H, W = 2, 4, 16, 16
    embed_dim = 32
    kh, kw = 7, 7

    key = jax.random.PRNGKey(0)
    kx, kw_key, kb_key = jax.random.split(key, 3)
    x = jax.random.normal(kx, (B, C, H, W), dtype=jnp.float32)
    weight = jax.random.normal(kw_key, (embed_dim, C, kh, kw), dtype=jnp.float32) * 0.02
    bias = jax.random.normal(kb_key, (embed_dim,), dtype=jnp.float32) * 0.01

    fwd = jax.jit(patch_embed_forward)
    out = jax.block_until_ready(fwd(x, weight, bias))

    ref = patch_embed_reference(x, weight, bias)
    assert out.shape == ref.shape == (B, 4, 4, embed_dim), (out.shape, ref.shape)
    # bf16 matmul operands with f32 accumulation -> small mixed-precision deviation.
    assert jnp.allclose(out, ref, atol=3e-2, rtol=3e-2), "mismatch vs reference conv"

    print("KERNEL_OK")
</pallas_src>

<mosaic_0001>
module attributes {stable_mosaic.version = 11 : i64} {
  func.func @_proj_kernel(%arg0: i32, %arg1: memref<32x196xbf16, #tpu.memory_space<vmem>>, %arg2: memref<196x32xbf16, #tpu.memory_space<vmem>>, %arg3: memref<1x32xf32, #tpu.memory_space<vmem>>, %arg4: memref<32x32xf32, #tpu.memory_space<vmem>>) attributes {dimension_semantics = [#tpu.dimension_semantics<parallel>], iteration_bounds = array<i64: 1>, scalar_prefetch = 0 : i64, scratch_operands = 0 : i64, tpu.core_type = #tpu.core_type<tc>, window_params = [{transform_indices = @transform_0, window_bounds = array<i64: 32, 196>}, {pipeline_mode = #tpu.pipeline_mode<synchronous>, transform_indices = @transform_1, window_bounds = array<i64: 196, 32>}, {pipeline_mode = #tpu.pipeline_mode<synchronous>, transform_indices = @transform_2, window_bounds = array<i64: 1, 32>}, {transform_indices = @transform_3, window_bounds = array<i64: 32, 32>}]} {
    %c0 = arith.constant 0 : index
    %c0_0 = arith.constant 0 : index
    %0 = vector.load %arg1[%c0, %c0_0] : memref<32x196xbf16, #tpu.memory_space<vmem>>, vector<32x196xbf16>
    %c0_1 = arith.constant 0 : index
    %c0_2 = arith.constant 0 : index
    %1 = vector.load %arg2[%c0_1, %c0_2] : memref<196x32xbf16, #tpu.memory_space<vmem>>, vector<196x32xbf16>
    %cst = arith.constant dense<0.000000e+00> : vector<32x32xf32>
    %2 = tpu.matmul %0, %1, %cst {dimension_numbers = #tpu.dot_dimension_numbers<[1], [0], [0], [1], [0, 0, 1, 1], [], []>} : vector<32x196xbf16>, vector<196x32xbf16>, vector<32x32xf32> -> vector<32x32xf32>
    %c0_3 = arith.constant 0 : index
    %c0_4 = arith.constant 0 : index
    %3 = vector.load %arg3[%c0_3, %c0_4] : memref<1x32xf32, #tpu.memory_space<vmem>>, vector<1x32xf32>
    %4 = vector.broadcast %3 : vector<1x32xf32> to vector<32x32xf32>
    %5 = arith.addf %2, %4 : vector<32x32xf32>
    %c0_5 = arith.constant 0 : index
    %c0_6 = arith.constant 0 : index
    %6 = vector.load %arg4[%c0_5, %c0_6] : memref<32x32xf32, #tpu.memory_space<vmem>>, vector<32x32xf32>
    tpu.vector_store %arg4[%c0_5, %c0_6], %5 {strides = array<i32>} : memref<32x32xf32, #tpu.memory_space<vmem>>, vector<32x32xf32>,
    return
  }
  func.func @transform_0(%arg0: i32) -> (i32, i32) {
    %c0_i32 = arith.constant 0 : i32
    %c0_i32_0 = arith.constant 0 : i32
    return %arg0, %c0_i32 : i32, i32
  }
  func.func @transform_1(%arg0: i32) -> (i32, i32) {
    %c0_i32 = arith.constant 0 : i32
    %c0_i32_0 = arith.constant 0 : i32
    %c0_i32_1 = arith.constant 0 : i32
    return %c0_i32, %c0_i32_0 : i32, i32
  }
  func.func @transform_2(%arg0: i32) -> (i32, i32) {
    %c0_i32 = arith.constant 0 : i32
    %c0_i32_0 = arith.constant 0 : i32
    %c0_i32_1 = arith.constant 0 : i32
    return %c0_i32, %c0_i32_0 : i32, i32
  }
  func.func @transform_3(%arg0: i32) -> (i32, i32) {
    %c0_i32 = arith.constant 0 : i32
    %c0_i32_0 = arith.constant 0 : i32
    return %arg0, %c0_i32 : i32, i32
  }
}

</mosaic_0001>

<llo_original>
// kernel: patch_embed_forward.1
$region0: #{patch_embed_forward.1}
  #allocation0 [shape = 'u32[]', space=smem, size = 0x4, offset = 0x4, fixed_abs, tag = 'smem constant byte address 0x4 - core index']
  #allocation1 [shape = 'u32[144,128]{1,0:T(1,128)}', space=vmem, size = 0x12000, scoped, tag = 'internal scratch']
  %s0 = inlined_call_operand.vmem [shape: bf16[32,196], index: 0, kind: input, shape index: {}]
  %s1 = inlined_call_operand.vmem [shape: bf16[196,32], index: 1, kind: input, shape index: {}]
  %s2 = inlined_call_operand.vmem [shape: f32[1,32], index: 2, kind: input, shape index: {}]
  %s3 = inlined_call_operand.hbm [shape: f32[32,32], index: 3, kind: output, shape index: {}]
  %s4 = sld [smem:[#allocation0]]
  $region22: #{patch_embed_forward.1} parent=0
    _
  %s6 = ssub.s32 1, %s4
  %s7 = scalar_select 0, %s6, %s4
  $region1: #{patch_embed_forward.1} parent=0
    #allocation2 [shape = 'u8[16384]{0}', space=vmem, size = 0x4000, scoped, tag = 'output window, operand 0, single buffered']
    #allocation3 [shape = 's32[1]{0}', space=sflag, size = 0x4, scoped, tag = 'scoped memory for patch_embed_forward.1']
    %8 = vsyncpa [#allocation3], 0
    // Predicated region
    $region2: #{patch_embed_forward.1} parent=1 // pred_check
      _
    $region3: #{patch_embed_forward.1} parent=1 // pred_check_branch
      %10 = sbr.rel (0) target = $region5
    $region4: #{patch_embed_forward.1} parent=1 // pred_region
      _
    $region5: #{patch_embed_forward.1} parent=1 // pred_fallthru
      _
    // Predicated region
    $region6: #{patch_embed_forward.1} parent=1 // pred_check
      _
    $region7: #{patch_embed_forward.1} parent=1 // pred_check_branch
      %12 = sbr.rel (0) target = $region9
    $region8: #{patch_embed_forward.1} parent=1 // pred_region
      _
    $region9: #{patch_embed_forward.1} parent=1 // pred_fallthru
      _
    // Predicated region
    $region10: #{patch_embed_forward.1} parent=1 // pred_check
      _
    $region11: #{patch_embed_forward.1} parent=1 // pred_check_branch
      %14 = sbr.rel (0) target = $region13
    $region12: #{patch_embed_forward.1} parent=1 // pred_region
      _
    $region13: #{patch_embed_forward.1} parent=1 // pred_fallthru
      _
    %v16 = vld [vmem:[%s0] sm:$0xff]
    %v17 = vld [vmem:[%s0 + $0x8] sm:$0xff]
    %v18 = vld [vmem:[%s0 + $0x10] sm:$0xff]
    %v19 = vld [vmem:[%s0 + $0x18] sm:$0xff]
    %v20 = vld [vmem:[%s1] sm:$0xf]
    %v21 = vld [vmem:[%s1 + $0x4] sm:$0xf]
    %v22 = vld [vmem:[%s1 + $0x8] sm:$0xf]
    %v23 = vld [vmem:[%s1 + $0xc] sm:$0xf]
    %v24 = vld [vmem:[%s1 + $0x10] sm:$0xf]
    %v25 = vld [vmem:[%s1 + $0x14] sm:$0xf]
    %v26 = vld [vmem:[%s1 + $0x18] sm:$0xf]
    %v27 = vld [vmem:[%s1 + $0x1c] sm:$0xf]
    %v28 = vld [vmem:[%s1 + $0x20] sm:$0xf]
    %v29 = vld [vmem:[%s1 + $0x24] sm:$0xf]
    %v30 = vld [vmem:[%s1 + $0x28] sm:$0xf]
    %v31 = vld [vmem:[%s1 + $0x2c] sm:$0xf]
    %v32 = vld [vmem:[%s1 + $0x30] sm:$0xf]
    %v33 = vld [vmem:[%s1 + $0x34] sm:$0xf]
    %v34 = vld [vmem:[%s1 + $0x38] sm:$0xf]
    %v35 = vld [vmem:[%s1 + $0x3c] sm:$0xf]
    %v36 = vld [vmem:[%s1 + $0x40] sm:$0xf]
    %v37 = vld [vmem:[%s1 + $0x44] sm:$0xf]
    %v38 = vld [vmem:[%s1 + $0x48] sm:$0xf]
    %v39 = vld [vmem:[%s1 + $0x4c] sm:$0xf]
    %v40 = vld [vmem:[%s1 + $0x50] sm:$0xf]
    %v41 = vld [vmem:[%s1 + $0x54] sm:$0xf]
    %v42 = vld [vmem:[%s1 + $0x58] sm:$0xf]
    %v43 = vld [vmem:[%s1 + $0x5c] sm:$0xf]
    %v44 = vld [vmem:[%s1 + $0x60] sm:$0x3]
    %v45 = vld [vmem:[%s2] sm:$0x1]
    %v47 = vlaneseq
    %v48 = vshrl.u32 %v47, 7
    %v49 = vsub.s32 0, %v48
    %v50 = vrot.slane %v45, %v49
    %v56 = vunpack.c.l.b16 %v16
    %v57 = vunpack.c.h.b16 %v16
    %v58 = vunpack.c.l.b16 %v17
    %v59 = vunpack.c.h.b16 %v17
    %v60 = vunpack.c.l.b16 %v18
    %v61 = vunpack.c.h.b16 %v18
    %v62 = vunpack.c.l.b16 %v19
    %v63 = vunpack.c.h.b16 %v19
    %v64 = vpack.c.b16 %v58, %v56
    %v65 = vpack.c.b16 %v59, %v57
    %v66 = vpack.c.b16 %v62, %v60
    %v67 = vpack.c.b16 %v63, %v61
    %v95 = vunpack.c.l.b16 %v20
    %v96 = vunpack.c.l.b16 %v21
    %v97 = vunpack.c.l.b16 %v22
    %v98 = vunpack.c.l.b16 %v23
    %v99 = vunpack.c.l.b16 %v24
    %v100 = vunpack.c.l.b16 %v25
    %v101 = vunpack.c.l.b16 %v26
    %v102 = vunpack.c.l.b16 %v27
    %v103 = vunpack.c.l.b16 %v28
    %v104 = vunpack.c.l.b16 %v29
    %v105 = vunpack.c.l.b16 %v30
    %v106 = vunpack.c.l.b16 %v31
    %v107 = vunpack.c.l.b16 %v32
    %v108 = vunpack.c.l.b16 %v33
    %v109 = vunpack.c.l.b16 %v34
    %v110 = vunpack.c.l.b16 %v35
    %v111 = vunpack.c.l.b16 %v36
    %v112 = vunpack.c.l.b16 %v37
    %v113 = vunpack.c.l.b16 %v38
    %v114 = vunpack.c.l.b16 %v39
    %v115 = vunpack.c.l.b16 %v40
    %v116 = vunpack.c.l.b16 %v41
    %v117 = vunpack.c.l.b16 %v42
    %v118 = vunpack.c.l.b16 %v43
    %v119 = vunpack.c.l.b16 %v44
    %v120 = vpack.c.b16 %v96, %v95
    %v121 = vpack.c.b16 %v98, %v97
    %v122 = vpack.c.b16 %v100, %v99
    %v123 = vpack.c.b16 %v102, %v101
    %v124 = vpack.c.b16 %v104, %v103
    %v125 = vpack.c.b16 %v106, %v105
    %v126 = vpack.c.b16 %v108, %v107
    %v127 = vpack.c.b16 %v110, %v109
    %v128 = vpack.c.b16 %v112, %v111
    %v129 = vpack.c.b16 %v114, %v113
    %v130 = vpack.c.b16 %v116, %v115
    %v131 = vpack.c.b16 %v118, %v117
    %v132 = vpack.c.b16 %v119, %v119
    %vm145 = vcmask 556032
    %v147 = vsel %vm145, %v65, 0
    %v150 = vsel %vm145, %v67, 0
    %vm152 = vcmask 1041408
    %v154 = vsel %vm152, %v132, 0
    %156 = vmatprep.subr.bf16.mxu0 0
    %157 = vmatpush1.bf16.msra.mxu0 %v127
    %158 = vmatprep.subr.bf16.mxu0 0
    %159 = vmatpush1.bf16.msra.mxu0 %v126
    %160 = vmatprep.subr.bf16.mxu0 0
    %161 = vmatpush1.bf16.msra.mxu0 %v125
    %162 = vmatprep.subr.bf16.mxu0 0
    %163 = vmatpush1.bf16.msra.mxu0 %v124
    %164 = vmatprep.subr.bf16.mxu0 0
    %165 = vmatpush1.bf16.msra.mxu0 %v123
    %166 = vmatprep.subr.bf16.mxu0 0
    %167 = vmatpush1.bf16.msra.mxu0 %v122
    %168 = vmatprep.subr.bf16.mxu0 0
    %169 = vmatpush1.bf16.msra.mxu0 %v121
    %170 = vmatprep.subr.bf16.mxu0 0
    %171 = vmatpush1.bf16.msra.mxu0 %v120
    %172 = vmatprep.subr.bf16.mxu0 0
    %173 = vmatpush2.bf16.msra.mxu0 0
    %174 = vmatprep.subr.bf16.mxu0 0
    %175 = vmatpush2.bf16.msra.mxu0 0
    %176 = vmatprep.subr.bf16.mxu0 0
    %177 = vmatpush2.bf16.msra.mxu0 0
    %178 = vmatprep.subr.bf16.mxu0 0
    %179 = vmatpush2.bf16.msra.mxu0 %v154
    %180 = vmatprep.subr.bf16.mxu0 0
    %181 = vmatpush2.bf16.msra.mxu0 %v131
    %182 = vmatprep.subr.bf16.mxu0 0
    %183 = vmatpush2.bf16.msra.mxu0 %v130
    %184 = vmatprep.subr.bf16.mxu0 0
    %185 = vmatpush2.bf16.msra.mxu0 %v129
    %186 = vmatprep.subr.bf16.mxu0 0
    %187 = vmatpush2.bf16.msra.mxu0 %v128
    %188 = vmatprep.mubr.bf16.mxu0 %v147
    %189 = vmatmul.mubr.bf16.gmra.mxu0 %v64
    %v190 = vpop.f32.mrf.mxu0
    %v191 = vadd.f32 %v50, %v190
    %v192 = vpop.f32.mrf.mxu0
    %v193 = vpop.f32.mrf.mxu0
    %v194 = vadd.f32 %v50, %v193
    %v195 = vpop.f32.mrf.mxu0
    %196 = vmatprep.mubr.bf16.mxu0 %v150
    %197 = vmatmul.mubr.bf16.gmra.mxu0 %v66
    %v198 = vpop.f32.mrf.mxu0
    %v199 = vadd.f32 %v50, %v198
    %v200 = vpop.f32.mrf.mxu0
    %v201 = vpop.f32.mrf.mxu0
    %v202 = vadd.f32 %v50, %v201
    %v203 = vpop.f32.mrf.mxu0
    %204 = vdwg.mxu0
    %vm205 = vcmask 261120
    %206 = vst.msk [vmem:[#allocation2] sm:$0xff] %vm205, %v191
    %207 = vst.msk [vmem:[#allocation2 + $0x8] sm:$0xff] %vm205, %v194
    %208 = vst.msk [vmem:[#allocation2 + $0x10] sm:$0xff] %vm205, %v199
    %209 = vst.msk [vmem:[#allocation2 + $0x18] sm:$0xff] %vm205, %v202
    // Predicated region
    $region14: #{patch_embed_forward.1} parent=1 // pred_check
      _
    $region15: #{patch_embed_forward.1} parent=1 // pred_check_branch
      %211 = sbr.rel (0) target = $region17
    $region16: #{patch_embed_forward.1} parent=1 // pred_region
      %s213 = ssub.s32 512, 512
      %214 = vsyncadd [#allocation3], %s213
      %s215 = sshll.u32 [#allocation2], 4
      %s216 = int_to_ptr.vmem [resolvable:$true] %s215
      %221 = dma.vmem_to_hbm [thread:$0]  %s216, 512, %s3, [#allocation3], 128, 128, 8
    $region17: #{patch_embed_forward.1} parent=1 // pred_fallthru
      _
    // Predicated region
    $region18: #{patch_embed_forward.1} parent=1 // pred_check
      _
    $region19: #{patch_embed_forward.1} parent=1 // pred_check_branch
      %223 = sbr.rel (0) target = $region21
    $region20: #{patch_embed_forward.1} parent=1 // pred_region
      %224 = dma.done [#allocation3], 512
    $region21: #{patch_embed_forward.1} parent=1 // pred_fallthru
      _
    %225 = vsyncpa [#allocation3], 1

</llo_original>
